<compile_context>
chip_gen: v7x
topology: tpu7x:2x2x1
jax: 0.10.0
libtpu: 0.0.40
codegen_flags: <defaults>
</compile_context>

<pallas_src>
import functools

import jax
import jax.numpy as jnp
from jax import lax
from jax.experimental import pallas as pl
from jax.experimental.pallas import tpu as pltpu


def _conv_relu_pool_kernel(a_ref, w_ref, b_ref, o_ref):
    # a_ref: (4, K, tm)  w_ref: (hidden, K)  b_ref: (hidden, 1)  o_ref: (hidden, tm)
    w = w_ref[...]
    # One MXU dot per pooling position; the "pool" is a balanced VPU max tree
    # over whole (hidden, tm) tiles -- no reshape/relayout, no XLU reductions.
    d0 = jnp.dot(w, a_ref[0], preferred_element_type=jnp.float32)
    d1 = jnp.dot(w, a_ref[1], preferred_element_type=jnp.float32)
    d2 = jnp.dot(w, a_ref[2], preferred_element_type=jnp.float32)
    d3 = jnp.dot(w, a_ref[3], preferred_element_type=jnp.float32)
    acc = jnp.maximum(jnp.maximum(d0, d1), jnp.maximum(d2, d3))
    # Bias + ReLU after the max (both monotone per row -> mathematically exact).
    o_ref[...] = jnp.maximum(acc + b_ref[...], 0.0).astype(o_ref.dtype)


def _vmem_budget_bytes():
    """Per-generation budget for the double-buffered working set (A tile + out tile)."""
    cap = 128 * 1024 * 1024
    try:
        info = pltpu.get_tpu_info()
        cap = int(getattr(info, "vmem_capacity_bytes", cap) or cap)
    except Exception:
        pass
    if cap <= 64 * 1024 * 1024:       # v7x: 64 MiB physical / 32 MiB default scoped
        return 20 * 1024 * 1024
    return 32 * 1024 * 1024           # v5e / v6e: 128 MiB physical


def _pick_tile(M, K, hidden, a_itemsize, budget):
    """Lane-tile tm (multiple of 128):
       * as large as the per-generation VMEM budget allows (cap 32768) so the
         ~0.35us/step grid overhead is amortized (kernel is HBM-read bound),
       * but >= 2 grid steps (even count when cheap) so v7x's two TensorCores
         both get work under dimension_semantics=("parallel",)."""
    # double-buffered streaming A tile + double-buffered f32 output tile, per column
    bytes_per_col = 2 * (4 * K * a_itemsize) + 2 * (hidden * 4)
    tm_vmem = max(128, min(32768, (budget // bytes_per_col) // 128 * 128))
    m_units = pl.cdiv(M, 128)          # M in 128-lane units
    if m_units <= 1:
        return 128
    tm = min(tm_vmem, max(128, (m_units // 2) * 128))   # keep >= 2 steps
    steps = pl.cdiv(m_units * 128, tm)
    if steps > 2 and steps % 2 == 1:
        # nudge tm down so the step count becomes even (load balance on v7x)
        tm_even = max(128, pl.cdiv(m_units, steps + 1) * 128)
        if pl.cdiv(m_units * 128, tm_even) % 2 == 0:
            tm = tm_even
    return tm


def cnn_forward(x, weight, bias, *, tm=None, compute_dtype=jnp.bfloat16,
                out_dtype=jnp.float32):
    """x: (B, C_in, H, W) NCHW; weight: (hidden, C_in, 2, 2); bias: (hidden,).
    Returns (B, hidden, H//4, W//4) NCHW, matching the PyTorch module.
    compute_dtype is the dtype of the streamed im2col tensor / weights fed to
    the MXU (default bf16 = fast path); accumulation, bias, pooling and the
    output stay float32 by default."""
    B, C, H, W = x.shape
    hidden = weight.shape[0]
    Hp, Wp = H // 4, W // 4
    assert Hp > 0 and Wp > 0, "spatial dims must be >= 4 (conv s2 + pool s2)"
    # PyTorch floors odd spatial sizes; the output only depends on this crop.
    x = x[:, :, : 4 * Hp, : 4 * Wp]
    K = C * 4
    M = B * Hp * Wp

    # Wrapper-side im2col into the pool-position-leading layout A[4, K, M].
    # (b, c, hp, ph, kh, wp, pw, kw) -> (ph, pw, c, kh, kw, b, hp, wp);
    # K ordering (c, kh, kw) matches the PyTorch OIHW weight flattening.
    xr = x.reshape(B, C, Hp, 2, 2, Wp, 2, 2)
    xr = jnp.transpose(xr, (3, 6, 1, 4, 7, 0, 2, 5))
    A = xr.reshape(4, K, M).astype(compute_dtype)

    Wmat = weight.reshape(hidden, K).astype(compute_dtype)   # (hidden, K)
    bvec = bias.reshape(hidden, 1).astype(jnp.float32)       # (hidden, 1)

    budget = _vmem_budget_bytes()
    if tm is None:
        tm = _pick_tile(M, K, hidden, jnp.dtype(compute_dtype).itemsize, budget)
    vmem_limit = int(budget + 8 * 1024 * 1024)

    out = pl.pallas_call(
        _conv_relu_pool_kernel,
        out_shape=jax.ShapeDtypeStruct((hidden, M), out_dtype),
        grid_spec=pltpu.PrefetchScalarGridSpec(
            num_scalar_prefetch=0,
            grid=(pl.cdiv(M, tm),),     # no jnp.pad: tail block is boundary-masked
            in_specs=[
                # Streaming A tile (default double buffering is enough at tm >= 8K).
                pl.BlockSpec((4, K, tm), lambda i: (0, 0, i)),
                # Weight / bias: constant index_map -> DMA'd once, kept resident.
                pl.BlockSpec((hidden, K), lambda i: (0, 0)),
                pl.BlockSpec((hidden, 1), lambda i: (0, 0)),
            ],
            out_specs=pl.BlockSpec((hidden, tm), lambda i: (0, i)),
        ),
        compiler_params=pltpu.CompilerParams(
            dimension_semantics=("parallel",),
            vmem_limit_bytes=vmem_limit),
    )(A, Wmat, bvec)

    out = out.reshape(hidden, B, Hp, Wp)
    return jnp.transpose(out, (1, 0, 2, 3))   # NCHW: (B, hidden, H//4, W//4)


def _reference(x, weight, bias):
    # pure-JAX reference: conv2d (k=2,s=2) + bias + relu + maxpool2d (k=2,s=2), NCHW
    y = lax.conv_general_dilated(
        x, weight, window_strides=(2, 2), padding="VALID",
        dimension_numbers=("NCHW", "OIHW", "NCHW"))
    y = y + bias[None, :, None, None]
    y = jnp.maximum(y, 0.0)
    y = lax.reduce_window(y, -jnp.inf, lax.max,
                          window_dimensions=(1, 1, 2, 2),
                          window_strides=(1, 1, 2, 2),
                          padding="VALID")
    return y


if __name__ == "__main__":
    key = jax.random.PRNGKey(0)
    kx, kw, kb = jax.random.split(key, 3)

    B, C_in, H, W = 2, 4, 16, 16
    hidden = 32

    x = jax.random.normal(kx, (B, C_in, H, W), dtype=jnp.float32)
    weight = jax.random.normal(kw, (hidden, C_in, 2, 2), dtype=jnp.float32) * 0.1
    bias = jax.random.normal(kb, (hidden,), dtype=jnp.float32) * 0.1

    ref = _reference(x, weight, bias)

    # Default fast path: bf16-streamed A/W, f32 accumulation + output.
    out = jax.block_until_ready(jax.jit(cnn_forward)(x, weight, bias))
    assert out.shape == (B, hidden, H // 4, W // 4), out.shape
    assert jnp.allclose(out, ref, atol=5e-2, rtol=5e-2), "bf16 mismatch vs reference"

    # float32 path matches the reference to tight tolerance.
    out_f32 = jax.block_until_ready(
        jax.jit(functools.partial(cnn_forward, compute_dtype=jnp.float32))(
            x, weight, bias))
    assert jnp.allclose(out_f32, ref, atol=1e-4, rtol=1e-4), "f32 mismatch vs reference"

    print("KERNEL_OK")
</pallas_src>

<mosaic_0001>
module attributes {stable_mosaic.version = 11 : i64} {
  func.func @_conv_relu_pool_kernel(%arg0: i32, %arg1: memref<4x16x128xbf16, #tpu.memory_space<vmem>>, %arg2: memref<32x16xbf16, #tpu.memory_space<vmem>>, %arg3: memref<32x1xf32, #tpu.memory_space<vmem>>, %arg4: memref<32x128xf32, #tpu.memory_space<vmem>>) attributes {dimension_semantics = [#tpu.dimension_semantics<parallel>], iteration_bounds = array<i64: 1>, scalar_prefetch = 0 : i64, scratch_operands = 0 : i64, tpu.core_type = #tpu.core_type<tc>, window_params = [{transform_indices = @transform_0, window_bounds = array<i64: 4, 16, 128>}, {pipeline_mode = #tpu.pipeline_mode<synchronous>, transform_indices = @transform_1, window_bounds = array<i64: 32, 16>}, {pipeline_mode = #tpu.pipeline_mode<synchronous>, transform_indices = @transform_2, window_bounds = array<i64: 32, 1>}, {transform_indices = @transform_3, window_bounds = array<i64: 32, 128>}]} {
    %c0 = arith.constant 0 : index
    %c0_0 = arith.constant 0 : index
    %0 = vector.load %arg2[%c0, %c0_0] : memref<32x16xbf16, #tpu.memory_space<vmem>>, vector<32x16xbf16>
    %c0_1 = arith.constant 0 : index
    %c0_2 = arith.constant 0 : index
    %c0_3 = arith.constant 0 : index
    %1 = vector.load %arg1[%c0_1, %c0_2, %c0_3] : memref<4x16x128xbf16, #tpu.memory_space<vmem>>, vector<1x16x128xbf16>
    %2 = vector.shape_cast %1 : vector<1x16x128xbf16> to vector<16x128xbf16>
    %cst = arith.constant dense<0.000000e+00> : vector<32x128xf32>
    %3 = tpu.matmul %0, %2, %cst {dimension_numbers = #tpu.dot_dimension_numbers<[1], [0], [0], [1], [0, 0, 1, 1], [], []>} : vector<32x16xbf16>, vector<16x128xbf16>, vector<32x128xf32> -> vector<32x128xf32>
    %c1 = arith.constant 1 : index
    %c0_4 = arith.constant 0 : index
    %c0_5 = arith.constant 0 : index
    %4 = vector.load %arg1[%c1, %c0_4, %c0_5] : memref<4x16x128xbf16, #tpu.memory_space<vmem>>, vector<1x16x128xbf16>
    %5 = vector.shape_cast %4 : vector<1x16x128xbf16> to vector<16x128xbf16>
    %cst_6 = arith.constant dense<0.000000e+00> : vector<32x128xf32>
    %6 = tpu.matmul %0, %5, %cst_6 {dimension_numbers = #tpu.dot_dimension_numbers<[1], [0], [0], [1], [0, 0, 1, 1], [], []>} : vector<32x16xbf16>, vector<16x128xbf16>, vector<32x128xf32> -> vector<32x128xf32>
    %c2 = arith.constant 2 : index
    %c0_7 = arith.constant 0 : index
    %c0_8 = arith.constant 0 : index
    %7 = vector.load %arg1[%c2, %c0_7, %c0_8] : memref<4x16x128xbf16, #tpu.memory_space<vmem>>, vector<1x16x128xbf16>
    %8 = vector.shape_cast %7 : vector<1x16x128xbf16> to vector<16x128xbf16>
    %cst_9 = arith.constant dense<0.000000e+00> : vector<32x128xf32>
    %9 = tpu.matmul %0, %8, %cst_9 {dimension_numbers = #tpu.dot_dimension_numbers<[1], [0], [0], [1], [0, 0, 1, 1], [], []>} : vector<32x16xbf16>, vector<16x128xbf16>, vector<32x128xf32> -> vector<32x128xf32>
    %c3 = arith.constant 3 : index
    %c0_10 = arith.constant 0 : index
    %c0_11 = arith.constant 0 : index
    %10 = vector.load %arg1[%c3, %c0_10, %c0_11] : memref<4x16x128xbf16, #tpu.memory_space<vmem>>, vector<1x16x128xbf16>
    %11 = vector.shape_cast %10 : vector<1x16x128xbf16> to vector<16x128xbf16>
    %cst_12 = arith.constant dense<0.000000e+00> : vector<32x128xf32>
    %12 = tpu.matmul %0, %11, %cst_12 {dimension_numbers = #tpu.dot_dimension_numbers<[1], [0], [0], [1], [0, 0, 1, 1], [], []>} : vector<32x16xbf16>, vector<16x128xbf16>, vector<32x128xf32> -> vector<32x128xf32>
    %13 = arith.maximumf %3, %6 : vector<32x128xf32>
    %14 = arith.maximumf %9, %12 : vector<32x128xf32>
    %15 = arith.maximumf %13, %14 : vector<32x128xf32>
    %c0_13 = arith.constant 0 : index
    %c0_14 = arith.constant 0 : index
    %16 = vector.load %arg3[%c0_13, %c0_14] : memref<32x1xf32, #tpu.memory_space<vmem>>, vector<32x1xf32>
    %17 = vector.broadcast %16 : vector<32x1xf32> to vector<32x128xf32>
    %18 = arith.addf %15, %17 : vector<32x128xf32>
    %cst_15 = arith.constant 0.000000e+00 : f32
    %19 = vector.broadcast %cst_15 : f32 to vector<32x128xf32>
    %20 = arith.maximumf %18, %19 : vector<32x128xf32>
    %c0_16 = arith.constant 0 : index
    %c0_17 = arith.constant 0 : index
    %21 = vector.load %arg4[%c0_16, %c0_17] : memref<32x128xf32, #tpu.memory_space<vmem>>, vector<32x128xf32>
    tpu.vector_store %arg4[%c0_16, %c0_17], %20 {strides = array<i32>} : memref<32x128xf32, #tpu.memory_space<vmem>>, vector<32x128xf32>,
    return
  }
  func.func @transform_0(%arg0: i32) -> (i32, i32, i32) {
    %c0_i32 = arith.constant 0 : i32
    %c0_i32_0 = arith.constant 0 : i32
    %c0_i32_1 = arith.constant 0 : i32
    return %c0_i32, %c0_i32_0, %arg0 : i32, i32, i32
  }
  func.func @transform_1(%arg0: i32) -> (i32, i32) {
    %c0_i32 = arith.constant 0 : i32
    %c0_i32_0 = arith.constant 0 : i32
    %c0_i32_1 = arith.constant 0 : i32
    return %c0_i32, %c0_i32_0 : i32, i32
  }
  func.func @transform_2(%arg0: i32) -> (i32, i32) {
    %c0_i32 = arith.constant 0 : i32
    %c0_i32_0 = arith.constant 0 : i32
    %c0_i32_1 = arith.constant 0 : i32
    return %c0_i32, %c0_i32_0 : i32, i32
  }
  func.func @transform_3(%arg0: i32) -> (i32, i32) {
    %c0_i32 = arith.constant 0 : i32
    %c0_i32_0 = arith.constant 0 : i32
    return %c0_i32, %arg0 : i32, i32
  }
}

</mosaic_0001>

<llo_original>
// kernel: cnn_forward.1
$region0: #{cnn_forward.1}
  #allocation0 [shape = 'u32[]', space=smem, size = 0x4, offset = 0x4, fixed_abs, tag = 'smem constant byte address 0x4 - core index']
  #allocation1 [shape = 'u32[144,128]{1,0:T(1,128)}', space=vmem, size = 0x12000, scoped, tag = 'internal scratch']
  %s0 = inlined_call_operand.vmem [shape: bf16[4,16,32], index: 0, kind: input, shape index: {}]
  %s1 = inlined_call_operand.vmem [shape: bf16[32,16], index: 1, kind: input, shape index: {}]
  %s2 = inlined_call_operand.vmem [shape: f32[32,1], index: 2, kind: input, shape index: {}]
  %s3 = inlined_call_operand.vmem [shape: f32[32,32], index: 3, kind: output, shape index: {}]
  %s4 = sld [smem:[#allocation0]]
  $region22: #{cnn_forward.1} parent=0
    _
  %s6 = ssub.s32 1, %s4
  %s7 = scalar_select 0, %s6, %s4
  // Predicated region
  $region2: #{cnn_forward.1} parent=0 // pred_check
    _
  $region3: #{cnn_forward.1} parent=0 // pred_check_branch
    %9 = sbr.rel (0) target = $region5
  $region4: #{cnn_forward.1} parent=0 // pred_region
    _
  $region5: #{cnn_forward.1} parent=0 // pred_fallthru
    _
  // Predicated region
  $region6: #{cnn_forward.1} parent=0 // pred_check
    _
  $region7: #{cnn_forward.1} parent=0 // pred_check_branch
    %11 = sbr.rel (0) target = $region9
  $region8: #{cnn_forward.1} parent=0 // pred_region
    _
  $region9: #{cnn_forward.1} parent=0 // pred_fallthru
    _
  // Predicated region
  $region10: #{cnn_forward.1} parent=0 // pred_check
    _
  $region11: #{cnn_forward.1} parent=0 // pred_check_branch
    %13 = sbr.rel (0) target = $region13
  $region12: #{cnn_forward.1} parent=0 // pred_region
    _
  $region13: #{cnn_forward.1} parent=0 // pred_fallthru
    _
  %v15 = vld [vmem:[%s1] sm:$0xf]
  %v16 = vld [vmem:[%s1 + $0x4] sm:$0xf]
  %v17 = vld [vmem:[%s1 + $0x8] sm:$0xf]
  %v18 = vld [vmem:[%s1 + $0xc] sm:$0xf]
  %v19 = vld [vmem:[%s0] sm:$0xf]
  %v20 = vld [vmem:[%s0 + $0x4] sm:$0xf]
  %v25 = vunpack.c.l.b16 %v15
  %v26 = vunpack.c.l.b16 %v16
  %v27 = vunpack.c.l.b16 %v17
  %v28 = vunpack.c.l.b16 %v18
  %v29 = vpack.c.b16 %v26, %v25
  %v30 = vpack.c.b16 %v28, %v27
  %v33 = vunpack.c.l.b16 %v19
  %v34 = vunpack.c.l.b16 %v20
  %v35 = vpack.c.b16 %v34, %v33
  %vm37 = vcmask 130048
  %v39 = vsel %vm37, %v29, 0
  %v42 = vsel %vm37, %v30, 0
  %44 = vmatprep.subr.bf16.mxu0 0
  %45 = vmatpush1.bf16.msra.mxu0 %v35
  %46 = vmatprep.subr.bf16.mxu0 0
  %47 = vmatpush1.bf16.msra.mxu0 0
  %48 = vmatprep.subr.bf16.mxu0 0
  %49 = vmatpush1.bf16.msra.mxu0 0
  %50 = vmatprep.subr.bf16.mxu0 0
  %51 = vmatpush1.bf16.msra.mxu0 0
  %52 = vmatprep.subr.bf16.mxu0 0
  %53 = vmatpush1.bf16.msra.mxu0 0
  %54 = vmatprep.subr.bf16.mxu0 0
  %55 = vmatpush1.bf16.msra.mxu0 0
  %56 = vmatprep.subr.bf16.mxu0 0
  %57 = vmatpush1.bf16.msra.mxu0 0
  %58 = vmatprep.subr.bf16.mxu0 0
  %59 = vmatpush1.bf16.msra.mxu0 0
  %60 = vmatprep.subr.bf16.mxu0 0
  %61 = vmatpush1.bf16.msra.mxu0 0
  %62 = vmatprep.subr.bf16.mxu0 0
  %63 = vmatpush1.bf16.msra.mxu0 0
  %64 = vmatprep.subr.bf16.mxu0 0
  %65 = vmatpush1.bf16.msra.mxu0 0
  %66 = vmatprep.subr.bf16.mxu0 0
  %67 = vmatpush1.bf16.msra.mxu0 0
  %68 = vmatprep.subr.bf16.mxu0 0
  %69 = vmatpush1.bf16.msra.mxu0 0
  %70 = vmatprep.subr.bf16.mxu0 0
  %71 = vmatpush1.bf16.msra.mxu0 0
  %72 = vmatprep.subr.bf16.mxu0 0
  %73 = vmatpush1.bf16.msra.mxu0 0
  %74 = vmatprep.subr.bf16.mxu0 0
  %75 = vmatpush1.bf16.msra.mxu0 0
  %76 = vmatprep.mubr.bf16.mxu0 0
  %77 = vmatmul.mubr.bf16.gmra.mrb[0].mxu0 %v39
  %v78 = vpop.f32.mrb[0].mxu0
  %v79 = vadd.f32 0.0, %v78
  %v80 = vpop.f32.mrb[0].mxu0
  %v81 = vpop.f32.mrb[0].mxu0
  %v82 = vadd.f32 0.0, %v81
  %v83 = vpop.f32.mrb[0].mxu0
  %84 = vmatprep.mubr.bf16.mxu0 0
  %85 = vmatmul.mubr.bf16.gmra.mrb[0].mxu0 %v42
  %v86 = vpop.f32.mrb[0].mxu0
  %v87 = vadd.f32 0.0, %v86
  %v88 = vpop.f32.mrb[0].mxu0
  %v89 = vpop.f32.mrb[0].mxu0
  %v90 = vadd.f32 0.0, %v89
  %v91 = vpop.f32.mrb[0].mxu0
  %92 = vdwg.mxu0
  %s93 = scalar_lea.vmem %s0, 8
  %v94 = vld [vmem:[%s93] sm:$0xf]
  %v95 = vld [vmem:[%s93 + $0x4] sm:$0xf]
  %v98 = vunpack.c.l.b16 %v94
  %v99 = vunpack.c.l.b16 %v95
  %v100 = vpack.c.b16 %v99, %v98
  %102 = vmatprep.subr.bf16.mxu0 0
  %103 = vmatpush1.bf16.msra.mxu0 %v100
  %104 = vmatprep.subr.bf16.mxu0 0
  %105 = vmatpush1.bf16.msra.mxu0 0
  %106 = vmatprep.subr.bf16.mxu0 0
  %107 = vmatpush1.bf16.msra.mxu0 0
  %108 = vmatprep.subr.bf16.mxu0 0
  %109 = vmatpush1.bf16.msra.mxu0 0
  %110 = vmatprep.subr.bf16.mxu0 0
  %111 = vmatpush1.bf16.msra.mxu0 0
  %112 = vmatprep.subr.bf16.mxu0 0
  %113 = vmatpush1.bf16.msra.mxu0 0
  %114 = vmatprep.subr.bf16.mxu0 0
  %115 = vmatpush1.bf16.msra.mxu0 0
  %116 = vmatprep.subr.bf16.mxu0 0
  %117 = vmatpush1.bf16.msra.mxu0 0
  %118 = vmatprep.subr.bf16.mxu0 0
  %119 = vmatpush1.bf16.msra.mxu0 0
  %120 = vmatprep.subr.bf16.mxu0 0
  %121 = vmatpush1.bf16.msra.mxu0 0
  %122 = vmatprep.subr.bf16.mxu0 0
  %123 = vmatpush1.bf16.msra.mxu0 0
  %124 = vmatprep.subr.bf16.mxu0 0
  %125 = vmatpush1.bf16.msra.mxu0 0
  %126 = vmatprep.subr.bf16.mxu0 0
  %127 = vmatpush1.bf16.msra.mxu0 0
  %128 = vmatprep.subr.bf16.mxu0 0
  %129 = vmatpush1.bf16.msra.mxu0 0
  %130 = vmatprep.subr.bf16.mxu0 0
  %131 = vmatpush1.bf16.msra.mxu0 0
  %132 = vmatprep.subr.bf16.mxu0 0
  %133 = vmatpush1.bf16.msra.mxu0 0
  %134 = vmatprep.mubr.bf16.mxu0 0
  %135 = vmatmul.mubr.bf16.gmra.mrb[0].mxu0 %v39
  %v136 = vpop.f32.mrb[0].mxu0
  %v137 = vadd.f32 0.0, %v136
  %v138 = vpop.f32.mrb[0].mxu0
  %v139 = vpop.f32.mrb[0].mxu0
  %v140 = vadd.f32 0.0, %v139
  %v141 = vpop.f32.mrb[0].mxu0
  %142 = vmatprep.mubr.bf16.mxu0 0
  %143 = vmatmul.mubr.bf16.gmra.mrb[0].mxu0 %v42
  %v144 = vpop.f32.mrb[0].mxu0
  %v145 = vadd.f32 0.0, %v144
  %v146 = vpop.f32.mrb[0].mxu0
  %v147 = vpop.f32.mrb[0].mxu0
  %v148 = vadd.f32 0.0, %v147
  %v149 = vpop.f32.mrb[0].mxu0
  %150 = vdwg.mxu0
  %s151 = scalar_lea.vmem %s0, 16
  %v152 = vld [vmem:[%s151] sm:$0xf]
  %v153 = vld [vmem:[%s151 + $0x4] sm:$0xf]
  %v156 = vunpack.c.l.b16 %v152
  %v157 = vunpack.c.l.b16 %v153
  %v158 = vpack.c.b16 %v157, %v156
  %160 = vmatprep.subr.bf16.mxu0 0
  %161 = vmatpush1.bf16.msra.mxu0 %v158
  %162 = vmatprep.subr.bf16.mxu0 0
  %163 = vmatpush1.bf16.msra.mxu0 0
  %164 = vmatprep.subr.bf16.mxu0 0
  %165 = vmatpush1.bf16.msra.mxu0 0
  %166 = vmatprep.subr.bf16.mxu0 0
  %167 = vmatpush1.bf16.msra.mxu0 0
  %168 = vmatprep.subr.bf16.mxu0 0
  %169 = vmatpush1.bf16.msra.mxu0 0
  %170 = vmatprep.subr.bf16.mxu0 0
  %171 = vmatpush1.bf16.msra.mxu0 0
  %172 = vmatprep.subr.bf16.mxu0 0
  %173 = vmatpush1.bf16.msra.mxu0 0
  %174 = vmatprep.subr.bf16.mxu0 0
  %175 = vmatpush1.bf16.msra.mxu0 0
  %176 = vmatprep.subr.bf16.mxu0 0
  %177 = vmatpush1.bf16.msra.mxu0 0
  %178 = vmatprep.subr.bf16.mxu0 0
  %179 = vmatpush1.bf16.msra.mxu0 0
  %180 = vmatprep.subr.bf16.mxu0 0
  %181 = vmatpush1.bf16.msra.mxu0 0
  %182 = vmatprep.subr.bf16.mxu0 0
  %183 = vmatpush1.bf16.msra.mxu0 0
  %184 = vmatprep.subr.bf16.mxu0 0
  %185 = vmatpush1.bf16.msra.mxu0 0
  %186 = vmatprep.subr.bf16.mxu0 0
  %187 = vmatpush1.bf16.msra.mxu0 0
  %188 = vmatprep.subr.bf16.mxu0 0
  %189 = vmatpush1.bf16.msra.mxu0 0
  %190 = vmatprep.subr.bf16.mxu0 0
  %191 = vmatpush1.bf16.msra.mxu0 0
  %192 = vmatprep.mubr.bf16.mxu0 0
  %193 = vmatmul.mubr.bf16.gmra.mrb[0].mxu0 %v39
  %v194 = vpop.f32.mrb[0].mxu0
  %v195 = vadd.f32 0.0, %v194
  %v196 = vpop.f32.mrb[0].mxu0
  %v197 = vpop.f32.mrb[0].mxu0
  %v198 = vadd.f32 0.0, %v197
  %v199 = vpop.f32.mrb[0].mxu0
  %200 = vmatprep.mubr.bf16.mxu0 0
  %201 = vmatmul.mubr.bf16.gmra.mrb[0].mxu0 %v42
  %v202 = vpop.f32.mrb[0].mxu0
  %v203 = vadd.f32 0.0, %v202
  %v204 = vpop.f32.mrb[0].mxu0
  %v205 = vpop.f32.mrb[0].mxu0
  %v206 = vadd.f32 0.0, %v205
  %v207 = vpop.f32.mrb[0].mxu0
  %208 = vdwg.mxu0
  %s209 = scalar_lea.vmem %s0, 24
  %v210 = vld [vmem:[%s209] sm:$0xf]
  %v211 = vld [vmem:[%s209 + $0x4] sm:$0xf]
  %v214 = vunpack.c.l.b16 %v210
  %v215 = vunpack.c.l.b16 %v211
  %v216 = vpack.c.b16 %v215, %v214
  %218 = vmatprep.subr.bf16.mxu0 0
  %219 = vmatpush1.bf16.msra.mxu0 %v216
  %220 = vmatprep.subr.bf16.mxu0 0
  %221 = vmatpush1.bf16.msra.mxu0 0
  %222 = vmatprep.subr.bf16.mxu0 0
  %223 = vmatpush1.bf16.msra.mxu0 0
  %224 = vmatprep.subr.bf16.mxu0 0
  %225 = vmatpush1.bf16.msra.mxu0 0
  %226 = vmatprep.subr.bf16.mxu0 0
  %227 = vmatpush1.bf16.msra.mxu0 0
  %228 = vmatprep.subr.bf16.mxu0 0
  %229 = vmatpush1.bf16.msra.mxu0 0
  %230 = vmatprep.subr.bf16.mxu0 0
  %231 = vmatpush1.bf16.msra.mxu0 0
  %232 = vmatprep.subr.bf16.mxu0 0
  %233 = vmatpush1.bf16.msra.mxu0 0
  %234 = vmatprep.subr.bf16.mxu0 0
  %235 = vmatpush1.bf16.msra.mxu0 0
  %236 = vmatprep.subr.bf16.mxu0 0
  %237 = vmatpush1.bf16.msra.mxu0 0
  %238 = vmatprep.subr.bf16.mxu0 0
  %239 = vmatpush1.bf16.msra.mxu0 0
  %240 = vmatprep.subr.bf16.mxu0 0
  %241 = vmatpush1.bf16.msra.mxu0 0
  %242 = vmatprep.subr.bf16.mxu0 0
  %243 = vmatpush1.bf16.msra.mxu0 0
  %244 = vmatprep.subr.bf16.mxu0 0
  %245 = vmatpush1.bf16.msra.mxu0 0
  %246 = vmatprep.subr.bf16.mxu0 0
  %247 = vmatpush1.bf16.msra.mxu0 0
  %248 = vmatprep.subr.bf16.mxu0 0
  %249 = vmatpush1.bf16.msra.mxu0 0
  %250 = vmatprep.mubr.bf16.mxu0 0
  %251 = vmatmul.mubr.bf16.gmra.mrb[0].mxu0 %v39
  %v252 = vpop.f32.mrb[0].mxu0
  %v253 = vadd.f32 0.0, %v252
  %v254 = vpop.f32.mrb[0].mxu0
  %v255 = vpop.f32.mrb[0].mxu0
  %v256 = vadd.f32 0.0, %v255
  %v257 = vpop.f32.mrb[0].mxu0
  %258 = vmatprep.mubr.bf16.mxu0 0
  %259 = vmatmul.mubr.bf16.gmra.mrb[0].mxu0 %v42
  %v260 = vpop.f32.mrb[0].mxu0
  %v261 = vadd.f32 0.0, %v260
  %v262 = vpop.f32.mrb[0].mxu0
  %v263 = vpop.f32.mrb[0].mxu0
  %v264 = vadd.f32 0.0, %v263
  %v265 = vpop.f32.mrb[0].mxu0
  %266 = vdwg.mxu0
  %v267 = vmax.f32 %v79, %v137
  %v268 = vmax.f32 %v82, %v140
  %v269 = vmax.f32 %v87, %v145
  %v270 = vmax.f32 %v90, %v148
  %v271 = vmax.f32 %v195, %v253
  %v272 = vmax.f32 %v198, %v256
  %v273 = vmax.f32 %v203, %v261
  %v274 = vmax.f32 %v206, %v264
  %v275 = vmax.f32 %v267, %v271
  %v276 = vmax.f32 %v268, %v272
  %v277 = vmax.f32 %v269, %v273
  %v278 = vmax.f32 %v270, %v274
  %v279 = vld [vmem:[%s2] sm:$0xff]
  %v280 = vld [vmem:[%s2 + $0x8] sm:$0xff]
  %v281 = vld [vmem:[%s2 + $0x10] sm:$0xff]
  %v282 = vld [vmem:[%s2 + $0x18] sm:$0xff]
  %284 = vset.pattern.permute.xlu0 0
  %285 = vperm.xlu0 %284, %v279
  %v286 = vpop.permute.xlu0 %285
  %289 = vset.pattern.permute.xlu0 0
  %290 = vperm.xlu0 %289, %v280
  %v291 = vpop.permute.xlu0 %290
  %294 = vset.pattern.permute.xlu0 0
  %295 = vperm.xlu0 %294, %v281
  %v296 = vpop.permute.xlu0 %295
  %299 = vset.pattern.permute.xlu0 0
  %300 = vperm.xlu0 %299, %v282
  %v301 = vpop.permute.xlu0 %300
  %v303 = vadd.f32 %v275, %v286
  %v304 = vadd.f32 %v276, %v291
  %v305 = vadd.f32 %v277, %v296
  %v306 = vadd.f32 %v278, %v301
  %v307 = vmax.f32 %v303, 0.0
  %v308 = vmax.f32 %v304, 0.0
  %v309 = vmax.f32 %v305, 0.0
  %v310 = vmax.f32 %v306, 0.0
  %311 = vst [vmem:[%s3] sm:$0xff] %v307
  %312 = vst [vmem:[%s3 + $0x8] sm:$0xff] %v308
  %313 = vst [vmem:[%s3 + $0x10] sm:$0xff] %v309
  %314 = vst [vmem:[%s3 + $0x18] sm:$0xff] %v310
  // Predicated region
  $region14: #{cnn_forward.1} parent=0 // pred_check
    _
  $region15: #{cnn_forward.1} parent=0 // pred_check_branch
    %316 = sbr.rel (0) target = $region17
  $region16: #{cnn_forward.1} parent=0 // pred_region
    _
  $region17: #{cnn_forward.1} parent=0 // pred_fallthru
    _
  // Predicated region
  $region18: #{cnn_forward.1} parent=0 // pred_check
    _
  $region19: #{cnn_forward.1} parent=0 // pred_check_branch
    %318 = sbr.rel (0) target = $region21
  $region20: #{cnn_forward.1} parent=0 // pred_region
    _
  $region21: #{cnn_forward.1} parent=0 // pred_fallthru
    _

</llo_original>
